<compile_context>
chip_gen: v6e
topology: v6e:2x2x1
jax: 0.10.0
libtpu: 0.0.40
codegen_flags: <defaults>
</compile_context>

<pallas_src>
import functools
import numpy as np
import jax
import jax.numpy as jnp
from jax.experimental import pallas as pl
from jax.experimental.pallas import tpu as pltpu


def _round_up(a, m):
    return ((a + m - 1) // m) * m


# ----------------------------- Pallas kernel -------------------------------
def soft_tree_kernel(x_ref, gwT_ref, gb_ref, sT_ref, cT_ref, z_ref, outT_ref,
                     *, depth, leaf_count):
    # x: (TB, F) batch-major tile; gwT: (G, F); gb: (G, 1); sT: (D*L, G);
    # cT: (D*L, 1); z: (O, L); out: (O, TB) lane-dense.
    x = x_ref[...]

    # Gating logits: contract the F axes of (G, F) and (TB, F) -> (G, TB).
    # Transposed-RHS MXU matmul keeps batch on the 128-lane axis with no
    # host-side transpose of x.
    logits = jax.lax.dot_general(
        gwT_ref[...], x,
        dimension_numbers=(((1,), (1,)), ((), ())),
        preferred_element_type=jnp.float32) + gb_ref[...]
    gat = jax.nn.sigmoid(logits)                                   # (G, TB) f32

    # One MXU pass for every (depth, leaf) path factor at once.
    factors = (jnp.dot(sT_ref[...], gat, preferred_element_type=jnp.float32)
               + cT_ref[...])                                      # (D*L, TB) f32

    L = leaf_count
    leaf = factors[0:L, :]                                         # level-0 factor
    for d in range(1, depth):                                      # static unroll (depth is small)
        leaf = leaf * factors[d * L:(d + 1) * L, :]                # (L, TB)

    # z stays f32 (tiny) -> full-precision final projection, lane-dense store.
    outT_ref[...] = jnp.dot(z_ref[...], leaf,
                            preferred_element_type=jnp.float32)    # (O, TB)


# ------------------------------ tile choice ---------------------------------
def _choose_batch_tile(B, tile_b):
    """Batch tile: big (amortize per-step overhead), 128-lane aligned, and small
    enough that large batches still give >= 2 grid steps (2-TC / megacore)."""
    if B <= 128:
        return B                     # single block covering the whole batch
    tb = max(128, (min(int(tile_b), B) // 128) * 128)
    tb = min(tb, _round_up(pl.cdiv(B, 2), 128))   # ensure grid >= 2 when B > 128
    return tb


# ------------------------------ forward wrapper ------------------------------
def soft_tree_forward(x, gw, gb, z, S_catT, C_catT, *, tile_b=8192,
                      use_bf16=False, batch_major_output=True):
    """x: (B, F), gw: (F, G), gb: (G,), z: (O, L), S_catT: (D*L, G), C_catT: (D*L, 1).

    Returns (B, O) if batch_major_output (module semantics), else the lane-dense
    (O, B) result straight from the kernel (preferred for a fused consumer)."""
    B, F = x.shape
    O, L = z.shape
    G = gw.shape[1]
    DL = S_catT.shape[0]
    depth = DL // L

    tb = _choose_batch_tile(B, tile_b)
    grid = (pl.cdiv(B, tb),)

    x_dtype = jnp.bfloat16 if use_bf16 else jnp.float32
    x_in = x.astype(x_dtype)                         # (B, F): no transpose / pad pass
    gwT = gw.T.astype(x_dtype)                       # (G, F): matches x dtype for native MXU dot
    gb2 = gb.reshape(G, 1).astype(jnp.float32)       # (G, 1)
    sT = S_catT.astype(jnp.float32)                  # (D*L, G)  (exact signed one-hot)
    cT = C_catT.astype(jnp.float32)                  # (D*L, 1)
    zz = z.astype(jnp.float32)                       # (O, L)    (kept f32 for precision)

    kernel = functools.partial(soft_tree_kernel, depth=depth, leaf_count=L)

    itemsize = 2 if use_bf16 else 4
    cost = pl.CostEstimate(
        flops=int(2 * B * (F * G + DL * G + L * O)),
        transcendentals=int(B * G),
        bytes_accessed=int(itemsize * B * F + 4 * B * O
                           + itemsize * G * F + 4 * (DL * G + DL + G + O * L)),
    )

    # VMEM budget: double-buffered x and out tiles + lane-dense f32 intermediates
    # (logits/gat, factors, leaf, out temp, possible transposed x copy) + slack.
    interm_rows = 2 * _round_up(G, 8) + _round_up(DL, 8) + 2 * _round_up(L, 8) + F
    vmem_need = (2 * F * tb * itemsize          # x tiles (double-buffered)
                 + 2 * O * tb * 4               # out tiles (double-buffered)
                 + interm_rows * tb * 4         # intermediates
                 + (2 << 20))                   # params + headroom
    vmem_limit = int(min(max(2 * vmem_need, 32 * 1024 * 1024), 48 * 1024 * 1024))

    outT = pl.pallas_call(
        kernel,
        out_shape=jax.ShapeDtypeStruct((O, B), jnp.float32),
        grid=grid,
        in_specs=[
            pl.BlockSpec((tb, F), lambda i: (i, 0)),   # x      : streamed per batch tile
            pl.BlockSpec((G, F), lambda i: (0, 0)),    # gw^T   : VMEM-resident across grid
            pl.BlockSpec((G, 1), lambda i: (0, 0)),    # gb
            pl.BlockSpec((DL, G), lambda i: (0, 0)),   # S_cat^T
            pl.BlockSpec((DL, 1), lambda i: (0, 0)),   # C_cat^T
            pl.BlockSpec((O, L), lambda i: (0, 0)),    # z (f32)
        ],
        out_specs=pl.BlockSpec((O, tb), lambda i: (0, i)),   # lane-dense unmasked store
        compiler_params=pltpu.CompilerParams(
            dimension_semantics=("parallel",),
            vmem_limit_bytes=vmem_limit,
        ),
        cost_estimate=cost,
    )(x_in, gwT, gb2, sT, cT, zz)

    if batch_major_output:
        # TODO(synk): for best end-to-end perf, consume the lane-dense (O, B)
        # output directly in the downstream op instead of transposing here.
        return outT.T                                            # (B, O)
    return outT                                                  # (O, B)


# ------------------------ tree topology (trace time) ------------------------
def build_path_tables(depth):
    """Signed one-hot path tables, concatenated over depth.

    Returns S_catT (D*L, G) and C_catT (D*L, 1) such that, in transposed layout,
        factors^T = S_catT @ gat^T + C_catT,
    where factors^T[d*L + j, b] is the level-d path factor of leaf j for sample b
    (gating if leaf j goes LEFT at level d, 1 - gating if it goes RIGHT).
    """
    L = 2 ** depth
    G = L - 1
    S = np.zeros((depth, G, L), np.float32)
    C = np.zeros((depth, 1, L), np.float32)
    for j in range(L):
        node = (L - 1) + j                       # full-tree index of leaf j
        path = []
        for _ in range(depth):
            parent = (node - 1) // 2
            is_left = (node == 2 * parent + 1)   # left child -> gating, right -> 1 - gating
            path.append((parent, is_left))
            node = parent
        path.reverse()
        for d, (g, is_left) in enumerate(path):
            if is_left:
                S[d, g, j] = 1.0
                C[d, 0, j] = 0.0
            else:
                S[d, g, j] = -1.0
                C[d, 0, j] = 1.0
    S_cat = np.concatenate([S[d] for d in range(depth)], axis=1)    # (G, D*L)
    C_cat = np.concatenate([C[d] for d in range(depth)], axis=1)    # (1, D*L)
    return jnp.asarray(S_cat.T), jnp.asarray(C_cat.T)               # (D*L, G), (D*L, 1)


# --------------------------- pure-JAX reference -----------------------------
def soft_tree_reference(x, gw, gb, z, depth):
    """Mirrors the PyTorch forward (projection='constant', dropout p=0)."""
    B = x.shape[0]
    L = 2 ** depth
    gatings = jax.nn.sigmoid(x @ gw + gb)              # (B, G)
    n_nodes = 2 ** (depth + 1) - 1
    dens = [jnp.ones((B,), jnp.float32)] + [None] * (n_nodes - 1)
    it = 1
    for d in range(1, depth + 1):
        for _ in range(2 ** d):
            parent = (it + 1) // 2 - 1
            child_way = (it + 1) % 2
            pg = gatings[:, parent] if child_way == 0 else 1.0 - gatings[:, parent]
            dens[it] = dens[parent] * pg
            it += 1
    node_densities = jnp.stack(dens, axis=1)           # (B, 2^(D+1)-1)
    leaf_probs = node_densities[:, -L:].T              # (L, B)
    return (z @ leaf_probs).T                          # (B, O)


# --------------------------------- main -------------------------------------
if __name__ == "__main__":
    in_features, out_features, depth = 32, 8, 3
    leaf_count = 2 ** depth                            # 8
    gate_count = leaf_count - 1                        # 7

    key = jax.random.PRNGKey(0)
    kx, kg, kz, kx2 = jax.random.split(key, 4)

    # Deterministic parameter init (kaiming_normal_, sigmoid gain=1, fan_in=in_features).
    gw = (jax.random.normal(kg, (gate_count, in_features), jnp.float32)
          * (1.0 / np.sqrt(in_features))).T            # (F, G)
    gb = jnp.zeros((gate_count,), jnp.float32)         # (G,)
    z = jax.random.normal(kz, (out_features, leaf_count), jnp.float32)  # (O, L)

    S_catT, C_catT = build_path_tables(depth)          # (D*L, G), (D*L, 1)

    # Small test: single block covering the whole batch.
    x = jax.random.normal(kx, (16, in_features), jnp.float32)
    out = jax.block_until_ready(
        soft_tree_forward(x, gw, gb, z, S_catT, C_catT, use_bf16=False))
    ref = soft_tree_reference(x, gw, gb, z, depth)
    np.testing.assert_allclose(np.asarray(out), np.asarray(ref), rtol=1e-4, atol=1e-4)

    # Multi-tile test: B=300 -> tb=256, grid=2, masked partial boundary block
    # (exercises the "no host-side padding" path and the grid>=2 clamp).
    x2 = jax.random.normal(kx2, (300, in_features), jnp.float32)
    out2 = jax.block_until_ready(
        soft_tree_forward(x2, gw, gb, z, S_catT, C_catT, use_bf16=False))
    ref2 = soft_tree_reference(x2, gw, gb, z, depth)
    np.testing.assert_allclose(np.asarray(out2), np.asarray(ref2), rtol=1e-4, atol=1e-4)

    print("KERNEL_OK")
</pallas_src>

<mosaic_0001>
module attributes {stable_mosaic.version = 11 : i64} {
  func.func @soft_tree_kernel(%arg0: i32, %arg1: memref<16x32xf32, #tpu.memory_space<vmem>>, %arg2: memref<7x32xf32, #tpu.memory_space<vmem>>, %arg3: memref<7x1xf32, #tpu.memory_space<vmem>>, %arg4: memref<24x7xf32, #tpu.memory_space<vmem>>, %arg5: memref<24x1xf32, #tpu.memory_space<vmem>>, %arg6: memref<8x8xf32, #tpu.memory_space<vmem>>, %arg7: memref<8x16xf32, #tpu.memory_space<vmem>>) attributes {dimension_semantics = [#tpu.dimension_semantics<parallel>], iteration_bounds = array<i64: 1>, scalar_prefetch = 0 : i64, scratch_operands = 0 : i64, tpu.core_type = #tpu.core_type<tc>, window_params = [{transform_indices = @transform_0, window_bounds = array<i64: 16, 32>}, {pipeline_mode = #tpu.pipeline_mode<synchronous>, transform_indices = @transform_1, window_bounds = array<i64: 7, 32>}, {pipeline_mode = #tpu.pipeline_mode<synchronous>, transform_indices = @transform_2, window_bounds = array<i64: 7, 1>}, {pipeline_mode = #tpu.pipeline_mode<synchronous>, transform_indices = @transform_3, window_bounds = array<i64: 24, 7>}, {pipeline_mode = #tpu.pipeline_mode<synchronous>, transform_indices = @transform_4, window_bounds = array<i64: 24, 1>}, {pipeline_mode = #tpu.pipeline_mode<synchronous>, transform_indices = @transform_5, window_bounds = array<i64: 8, 8>}, {transform_indices = @transform_6, window_bounds = array<i64: 8, 16>}]} {
    %c0 = arith.constant 0 : index
    %c0_0 = arith.constant 0 : index
    %0 = vector.load %arg1[%c0, %c0_0] : memref<16x32xf32, #tpu.memory_space<vmem>>, vector<16x32xf32>
    %c0_1 = arith.constant 0 : index
    %c0_2 = arith.constant 0 : index
    %1 = vector.load %arg2[%c0_1, %c0_2] : memref<7x32xf32, #tpu.memory_space<vmem>>, vector<7x32xf32>
    %cst = arith.constant dense<0.000000e+00> : vector<7x16xf32>
    %2 = tpu.matmul %1, %0, %cst {dimension_numbers = #tpu.dot_dimension_numbers<[1], [1], [0], [0], [0, 0, 1, 0], [], []>} : vector<7x32xf32>, vector<16x32xf32>, vector<7x16xf32> -> vector<7x16xf32>
    %c0_3 = arith.constant 0 : index
    %c0_4 = arith.constant 0 : index
    %3 = vector.load %arg3[%c0_3, %c0_4] : memref<7x1xf32, #tpu.memory_space<vmem>>, vector<7x1xf32>
    %4 = vector.broadcast %3 : vector<7x1xf32> to vector<7x16xf32>
    %5 = arith.addf %2, %4 : vector<7x16xf32>
    %6 = arith.negf %5 : vector<7x16xf32>
    %7 = math.exp %6 : vector<7x16xf32>
    %cst_5 = arith.constant 1.000000e+00 : f32
    %8 = vector.broadcast %cst_5 : f32 to vector<7x16xf32>
    %9 = arith.addf %8, %7 : vector<7x16xf32>
    %10 = arith.divf %8, %9 : vector<7x16xf32>
    %c0_6 = arith.constant 0 : index
    %c0_7 = arith.constant 0 : index
    %11 = vector.load %arg4[%c0_6, %c0_7] : memref<24x7xf32, #tpu.memory_space<vmem>>, vector<24x7xf32>
    %cst_8 = arith.constant dense<0.000000e+00> : vector<24x16xf32>
    %12 = tpu.matmul %11, %10, %cst_8 {dimension_numbers = #tpu.dot_dimension_numbers<[1], [0], [0], [1], [0, 0, 1, 1], [], []>} : vector<24x7xf32>, vector<7x16xf32>, vector<24x16xf32> -> vector<24x16xf32>
    %c0_9 = arith.constant 0 : index
    %c0_10 = arith.constant 0 : index
    %13 = vector.load %arg5[%c0_9, %c0_10] : memref<24x1xf32, #tpu.memory_space<vmem>>, vector<24x1xf32>
    %14 = vector.broadcast %13 : vector<24x1xf32> to vector<24x16xf32>
    %15 = arith.addf %12, %14 : vector<24x16xf32>
    %16 = vector.extract_strided_slice %15 {offsets = [0, 0], sizes = [8, 16], strides = [1, 1]} : vector<24x16xf32> to vector<8x16xf32>
    %17 = vector.extract_strided_slice %15 {offsets = [8, 0], sizes = [8, 16], strides = [1, 1]} : vector<24x16xf32> to vector<8x16xf32>
    %18 = arith.mulf %16, %17 : vector<8x16xf32>
    %19 = vector.extract_strided_slice %15 {offsets = [16, 0], sizes = [8, 16], strides = [1, 1]} : vector<24x16xf32> to vector<8x16xf32>
    %20 = arith.mulf %18, %19 : vector<8x16xf32>
    %c0_11 = arith.constant 0 : index
    %c0_12 = arith.constant 0 : index
    %21 = vector.load %arg6[%c0_11, %c0_12] : memref<8x8xf32, #tpu.memory_space<vmem>>, vector<8x8xf32>
    %cst_13 = arith.constant dense<0.000000e+00> : vector<8x16xf32>
    %22 = tpu.matmul %21, %20, %cst_13 {dimension_numbers = #tpu.dot_dimension_numbers<[1], [0], [0], [1], [0, 0, 1, 1], [], []>} : vector<8x8xf32>, vector<8x16xf32>, vector<8x16xf32> -> vector<8x16xf32>
    %c0_14 = arith.constant 0 : index
    %c0_15 = arith.constant 0 : index
    %23 = vector.load %arg7[%c0_14, %c0_15] : memref<8x16xf32, #tpu.memory_space<vmem>>, vector<8x16xf32>
    tpu.vector_store %arg7[%c0_14, %c0_15], %22 {strides = array<i32>} : memref<8x16xf32, #tpu.memory_space<vmem>>, vector<8x16xf32>,
    return
  }
  func.func @transform_0(%arg0: i32) -> (i32, i32) {
    %c0_i32 = arith.constant 0 : i32
    %c0_i32_0 = arith.constant 0 : i32
    return %arg0, %c0_i32 : i32, i32
  }
  func.func @transform_1(%arg0: i32) -> (i32, i32) {
    %c0_i32 = arith.constant 0 : i32
    %c0_i32_0 = arith.constant 0 : i32
    %c0_i32_1 = arith.constant 0 : i32
    return %c0_i32, %c0_i32_0 : i32, i32
  }
  func.func @transform_2(%arg0: i32) -> (i32, i32) {
    %c0_i32 = arith.constant 0 : i32
    %c0_i32_0 = arith.constant 0 : i32
    %c0_i32_1 = arith.constant 0 : i32
    return %c0_i32, %c0_i32_0 : i32, i32
  }
  func.func @transform_3(%arg0: i32) -> (i32, i32) {
    %c0_i32 = arith.constant 0 : i32
    %c0_i32_0 = arith.constant 0 : i32
    %c0_i32_1 = arith.constant 0 : i32
    return %c0_i32, %c0_i32_0 : i32, i32
  }
  func.func @transform_4(%arg0: i32) -> (i32, i32) {
    %c0_i32 = arith.constant 0 : i32
    %c0_i32_0 = arith.constant 0 : i32
    %c0_i32_1 = arith.constant 0 : i32
    return %c0_i32, %c0_i32_0 : i32, i32
  }
  func.func @transform_5(%arg0: i32) -> (i32, i32) {
    %c0_i32 = arith.constant 0 : i32
    %c0_i32_0 = arith.constant 0 : i32
    %c0_i32_1 = arith.constant 0 : i32
    return %c0_i32, %c0_i32_0 : i32, i32
  }
  func.func @transform_6(%arg0: i32) -> (i32, i32) {
    %c0_i32 = arith.constant 0 : i32
    %c0_i32_0 = arith.constant 0 : i32
    return %c0_i32, %arg0 : i32, i32
  }
}

</mosaic_0001>

<llo_original>
// kernel: tpu_custom_call.1
$region0: #{tpu_custom_call.1}
  #allocation0 [shape = 'u32[]', space=smem, size = 0x4, offset = 0x4, fixed_abs, tag = 'smem constant byte address 0x4 - core index']
  #allocation1 [shape = 'u32[144,128]{1,0:T(1,128)}', space=vmem, size = 0x12000, scoped, tag = 'internal scratch']
  %s0 = inlined_call_operand.vmem [shape: f32[16,32], index: 0, kind: input, shape index: {}]
  %s1 = inlined_call_operand.vmem [shape: f32[7,32], index: 1, kind: input, shape index: {}]
  %s2 = inlined_call_operand.vmem [shape: f32[7,1], index: 2, kind: input, shape index: {}]
  %s3 = inlined_call_operand.vmem [shape: f32[24,7], index: 3, kind: input, shape index: {}]
  %s4 = inlined_call_operand.vmem [shape: f32[24,1], index: 4, kind: input, shape index: {}]
  %s5 = inlined_call_operand.vmem [shape: f32[8,8], index: 5, kind: input, shape index: {}]
  %s6 = inlined_call_operand.hbm [shape: f32[8,16], index: 6, kind: output, shape index: {}]
  %s7 = sld [smem:[#allocation0]]
  $region34: #{tpu_custom_call.1} parent=0
    _
  %s9 = ssub.s32 1, %s7
  %s10 = scalar_select 0, %s9, %s7
  $region1: #{tpu_custom_call.1} parent=0
    #allocation2 [shape = 'u8[4096]{0}', space=vmem, size = 0x1000, scoped, tag = 'output window, operand 0, single buffered']
    #allocation3 [shape = 's32[1]{0}', space=sflag, size = 0x4, scoped, tag = 'scoped memory for tpu_custom_call.1']
    %11 = vsyncpa [#allocation3], 0
    // Predicated region
    $region2: #{tpu_custom_call.1} parent=1 // pred_check
      _
    $region3: #{tpu_custom_call.1} parent=1 // pred_check_branch
      %13 = sbr.rel (0) target = $region5
    $region4: #{tpu_custom_call.1} parent=1 // pred_region
      _
    $region5: #{tpu_custom_call.1} parent=1 // pred_fallthru
      _
    // Predicated region
    $region6: #{tpu_custom_call.1} parent=1 // pred_check
      _
    $region7: #{tpu_custom_call.1} parent=1 // pred_check_branch
      %15 = sbr.rel (0) target = $region9
    $region8: #{tpu_custom_call.1} parent=1 // pred_region
      _
    $region9: #{tpu_custom_call.1} parent=1 // pred_fallthru
      _
    // Predicated region
    $region10: #{tpu_custom_call.1} parent=1 // pred_check
      _
    $region11: #{tpu_custom_call.1} parent=1 // pred_check_branch
      %17 = sbr.rel (0) target = $region13
    $region12: #{tpu_custom_call.1} parent=1 // pred_region
      _
    $region13: #{tpu_custom_call.1} parent=1 // pred_fallthru
      _
    // Predicated region
    $region14: #{tpu_custom_call.1} parent=1 // pred_check
      _
    $region15: #{tpu_custom_call.1} parent=1 // pred_check_branch
      %19 = sbr.rel (0) target = $region17
    $region16: #{tpu_custom_call.1} parent=1 // pred_region
      _
    $region17: #{tpu_custom_call.1} parent=1 // pred_fallthru
      _
    // Predicated region
    $region18: #{tpu_custom_call.1} parent=1 // pred_check
      _
    $region19: #{tpu_custom_call.1} parent=1 // pred_check_branch
      %21 = sbr.rel (0) target = $region21
    $region20: #{tpu_custom_call.1} parent=1 // pred_region
      _
    $region21: #{tpu_custom_call.1} parent=1 // pred_fallthru
      _
    // Predicated region
    $region22: #{tpu_custom_call.1} parent=1 // pred_check
      _
    $region23: #{tpu_custom_call.1} parent=1 // pred_check_branch
      %23 = sbr.rel (0) target = $region25
    $region24: #{tpu_custom_call.1} parent=1 // pred_region
      _
    $region25: #{tpu_custom_call.1} parent=1 // pred_fallthru
      _
    %v24 = vld [vmem:[%s0] sm:$0xff]
    %v25 = vld [vmem:[%s0 + $0x8] sm:$0xff]
    %v26 = vld [vmem:[%s1] sm:$0x7f]
    %v27 = vld [vmem:[%s2] sm:$0x7f]
    %29 = vset.pattern.permute.xlu0 0
    %30 = vperm.xlu0 %29, %v27
    %v31 = vpop.permute.xlu0 %30
    %vm33 = vcmask 261120
    %v35 = vsel %vm33, %v26, 0
    %v38 = vsel %vm33, %v24, 0
    %v41 = vsel %vm33, %v25, 0
    %43 = vmatprep.subr.mxu0 0.0
    %44 = vmatpush1.xpose.msra.mxu0 0.0
    %45 = vmatprep.subr.mxu0 0.0
    %46 = vmatpush1.xpose.msra.mxu0 0.0
    %47 = vmatprep.subr.mxu0 0.0
    %48 = vmatpush1.xpose.msra.mxu0 0.0
    %49 = vmatprep.subr.mxu0 0.0
    %50 = vmatpush1.xpose.msra.mxu0 0.0
    %51 = vmatprep.subr.mxu0 0.0
    %52 = vmatpush1.xpose.msra.mxu0 0.0
    %53 = vmatprep.subr.mxu0 0.0
    %54 = vmatpush1.xpose.msra.mxu0 0.0
    %55 = vmatprep.subr.mxu0 0.0
    %56 = vmatpush1.xpose.msra.mxu0 0.0
    %57 = vmatprep.subr.mxu0 0.0
    %58 = vmatpush1.xpose.msra.mxu0 0.0
    %59 = vmatprep.subr.mxu0 0.0
    %60 = vmatpush1.xpose.msra.mxu0 0.0
    %61 = vmatprep.subr.mxu0 0.0
    %62 = vmatpush1.xpose.msra.mxu0 0.0
    %63 = vmatprep.subr.mxu0 0.0
    %64 = vmatpush1.xpose.msra.mxu0 0.0
    %65 = vmatprep.subr.mxu0 0.0
    %66 = vmatpush1.xpose.msra.mxu0 0.0
    %67 = vmatprep.subr.mxu0 0.0
    %68 = vmatpush1.xpose.msra.mxu0 0.0
    %69 = vmatprep.subr.mxu0 0.0
    %70 = vmatpush1.xpose.msra.mxu0 0.0
    %71 = vmatprep.subr.mxu0 0.0
    %72 = vmatpush1.xpose.msra.mxu0 %v41
    %73 = vmatprep.subr.mxu0 0.0
    %74 = vmatpush1.xpose.msra.mxu0 %v38
    %75 = vmatprep.subr.mxu0 0.0
    %76 = vmatpush2.xpose.msra.mxu0 0.0
    %77 = vmatprep.subr.mxu0 0.0
    %78 = vmatpush2.xpose.msra.mxu0 0.0
    %79 = vmatprep.subr.mxu0 0.0
    %80 = vmatpush2.xpose.msra.mxu0 0.0
    %81 = vmatprep.subr.mxu0 0.0
    %82 = vmatpush2.xpose.msra.mxu0 0.0
    %83 = vmatprep.subr.mxu0 0.0
    %84 = vmatpush2.xpose.msra.mxu0 0.0
    %85 = vmatprep.subr.mxu0 0.0
    %86 = vmatpush2.xpose.msra.mxu0 0.0
    %87 = vmatprep.subr.mxu0 0.0
    %88 = vmatpush2.xpose.msra.mxu0 0.0
    %89 = vmatprep.subr.mxu0 0.0
    %90 = vmatpush2.xpose.msra.mxu0 0.0
    %91 = vmatprep.subr.mxu0 0.0
    %92 = vmatpush2.xpose.msra.mxu0 0.0
    %93 = vmatprep.subr.mxu0 0.0
    %94 = vmatpush2.xpose.msra.mxu0 0.0
    %95 = vmatprep.subr.mxu0 0.0
    %96 = vmatpush2.xpose.msra.mxu0 0.0
    %97 = vmatprep.subr.mxu0 0.0
    %98 = vmatpush2.xpose.msra.mxu0 0.0
    %99 = vmatprep.subr.mxu0 0.0
    %100 = vmatpush2.xpose.msra.mxu0 0.0
    %101 = vmatprep.subr.mxu0 0.0
    %102 = vmatpush2.xpose.msra.mxu0 0.0
    %103 = vmatprep.subr.mxu0 0.0
    %104 = vmatpush2.xpose.msra.mxu0 0.0
    %105 = vmatprep.subr.mxu0 0.0
    %106 = vmatpush2.xpose.msra.mxu0 0.0
    %107 = vmatprep.mubr.f32.mxu0 0.0
    %108 = vmatmul.mubr.f32.gmra.mxu0 %v35
    %v109 = vpop.f32.mrf.mxu0
    %v110 = vadd.f32 %v31, %v109
    %v111 = vpop.f32.mrf.mxu0
    %112 = vdwg.mxu0
    %v113 = vxor.u32 %v110, 2147483648
    %v114 = vmul.f32 %v113, 1.442695
    %v115 = vpow.pop %v114
    %v116 = vadd.f32 %v115, 1.0
    %v117 = vrcp.pop %v116
    %v118 = vmul.f32 1.0, %v117
    %v119 = vld [vmem:[%s3] sm:$0xff]
    %v120 = vld [vmem:[%s3 + $0x8] sm:$0xff]
    %v121 = vld [vmem:[%s3 + $0x10] sm:$0xff]
    %v122 = vld [vmem:[%s4] sm:$0xff]
    %v123 = vld [vmem:[%s4 + $0x8] sm:$0xff]
    %v124 = vld [vmem:[%s4 + $0x10] sm:$0xff]
    %126 = vset.pattern.permute.xlu0 0
    %127 = vperm.xlu0 %126, %v122
    %v128 = vpop.permute.xlu0 %127
    %131 = vset.pattern.permute.xlu0 0
    %132 = vperm.xlu0 %131, %v123
    %v133 = vpop.permute.xlu0 %132
    %136 = vset.pattern.permute.xlu0 0
    %137 = vperm.xlu0 %136, %v124
    %v138 = vpop.permute.xlu0 %137
    %vm140 = vcmask 56320
    %v142 = vsel %vm140, %v119, 0
    %v145 = vsel %vm140, %v120, 0
    %v148 = vsel %vm140, %v121, 0
    %vm150 = vcmask 1046528
    %v152 = vsel %vm150, %v118, 0
    %154 = vmatprep.subr.mxu0 0.0
    %155 = vmatpush1.msra.mxu0 0.0
    %156 = vmatprep.subr.mxu0 0.0
    %157 = vmatpush1.msra.mxu0 0.0
    %158 = vmatprep.subr.mxu0 0.0
    %159 = vmatpush1.msra.mxu0 0.0
    %160 = vmatprep.subr.mxu0 0.0
    %161 = vmatpush1.msra.mxu0 0.0
    %162 = vmatprep.subr.mxu0 0.0
    %163 = vmatpush1.msra.mxu0 0.0
    %164 = vmatprep.subr.mxu0 0.0
    %165 = vmatpush1.msra.mxu0 0.0
    %166 = vmatprep.subr.mxu0 0.0
    %167 = vmatpush1.msra.mxu0 0.0
    %168 = vmatprep.subr.mxu0 0.0
    %169 = vmatpush1.msra.mxu0 0.0
    %170 = vmatprep.subr.mxu0 0.0
    %171 = vmatpush1.msra.mxu0 0.0
    %172 = vmatprep.subr.mxu0 0.0
    %173 = vmatpush1.msra.mxu0 0.0
    %174 = vmatprep.subr.mxu0 0.0
    %175 = vmatpush1.msra.mxu0 0.0
    %176 = vmatprep.subr.mxu0 0.0
    %177 = vmatpush1.msra.mxu0 0.0
    %178 = vmatprep.subr.mxu0 0.0
    %179 = vmatpush1.msra.mxu0 0.0
    %180 = vmatprep.subr.mxu0 0.0
    %181 = vmatpush1.msra.mxu0 0.0
    %182 = vmatprep.subr.mxu0 0.0
    %183 = vmatpush1.msra.mxu0 0.0
    %184 = vmatprep.subr.mxu0 0.0
    %185 = vmatpush1.msra.mxu0 %v152
    %186 = vmatprep.subr.mxu0 0.0
    %187 = vmatpush2.msra.mxu0 0.0
    %188 = vmatprep.subr.mxu0 0.0
    %189 = vmatpush2.msra.mxu0 0.0
    %190 = vmatprep.subr.mxu0 0.0
    %191 = vmatpush2.msra.mxu0 0.0
    %192 = vmatprep.subr.mxu0 0.0
    %193 = vmatpush2.msra.mxu0 0.0
    %194 = vmatprep.subr.mxu0 0.0
    %195 = vmatpush2.msra.mxu0 0.0
    %196 = vmatprep.subr.mxu0 0.0
    %197 = vmatpush2.msra.mxu0 0.0
    %198 = vmatprep.subr.mxu0 0.0
    %199 = vmatpush2.msra.mxu0 0.0
    %200 = vmatprep.subr.mxu0 0.0
    %201 = vmatpush2.msra.mxu0 0.0
    %202 = vmatprep.subr.mxu0 0.0
    %203 = vmatpush2.msra.mxu0 0.0
    %204 = vmatprep.subr.mxu0 0.0
    %205 = vmatpush2.msra.mxu0 0.0
    %206 = vmatprep.subr.mxu0 0.0
    %207 = vmatpush2.msra.mxu0 0.0
    %208 = vmatprep.subr.mxu0 0.0
    %209 = vmatpush2.msra.mxu0 0.0
    %210 = vmatprep.subr.mxu0 0.0
    %211 = vmatpush2.msra.mxu0 0.0
    %212 = vmatprep.subr.mxu0 0.0
    %213 = vmatpush2.msra.mxu0 0.0
    %214 = vmatprep.subr.mxu0 0.0
    %215 = vmatpush2.msra.mxu0 0.0
    %216 = vmatprep.subr.mxu0 0.0
    %217 = vmatpush2.msra.mxu0 0.0
    %218 = vmatprep.mubr.f32.mxu0 0.0
    %219 = vmatmul.mubr.f32.gmra.mxu0 %v142
    %v220 = vpop.f32.mrf.mxu0
    %v221 = vadd.f32 %v128, %v220
    %v222 = vpop.f32.mrf.mxu0
    %223 = vmatprep.mubr.f32.mxu0 0.0
    %224 = vmatmul.mubr.f32.gmra.mxu0 %v145
    %v225 = vpop.f32.mrf.mxu0
    %v226 = vadd.f32 %v133, %v225
    %v227 = vpop.f32.mrf.mxu0
    %228 = vmatprep.mubr.f32.mxu0 0.0
    %229 = vmatmul.mubr.f32.gmra.mxu0 %v148
    %v230 = vpop.f32.mrf.mxu0
    %v231 = vadd.f32 %v138, %v230
    %v232 = vpop.f32.mrf.mxu0
    %233 = vdwg.mxu0
    %v234 = vmul.f32 %v221, %v226
    %v235 = vmul.f32 %v234, %v231
    %v236 = vld [vmem:[%s5] sm:$0xff]
    %vm237 = vcmask 64512
    %v239 = vsel %vm237, %v236, 0
    %241 = vmatprep.subr.mxu0 0.0
    %242 = vmatpush1.msra.mxu0 0.0
    %243 = vmatprep.subr.mxu0 0.0
    %244 = vmatpush1.msra.mxu0 0.0
    %245 = vmatprep.subr.mxu0 0.0
    %246 = vmatpush1.msra.mxu0 0.0
    %247 = vmatprep.subr.mxu0 0.0
    %248 = vmatpush1.msra.mxu0 0.0
    %249 = vmatprep.subr.mxu0 0.0
    %250 = vmatpush1.msra.mxu0 0.0
    %251 = vmatprep.subr.mxu0 0.0
    %252 = vmatpush1.msra.mxu0 0.0
    %253 = vmatprep.subr.mxu0 0.0
    %254 = vmatpush1.msra.mxu0 0.0
    %255 = vmatprep.subr.mxu0 0.0
    %256 = vmatpush1.msra.mxu0 0.0
    %257 = vmatprep.subr.mxu0 0.0
    %258 = vmatpush1.msra.mxu0 0.0
    %259 = vmatprep.subr.mxu0 0.0
    %260 = vmatpush1.msra.mxu0 0.0
    %261 = vmatprep.subr.mxu0 0.0
    %262 = vmatpush1.msra.mxu0 0.0
    %263 = vmatprep.subr.mxu0 0.0
    %264 = vmatpush1.msra.mxu0 0.0
    %265 = vmatprep.subr.mxu0 0.0
    %266 = vmatpush1.msra.mxu0 0.0
    %267 = vmatprep.subr.mxu0 0.0
    %268 = vmatpush1.msra.mxu0 0.0
    %269 = vmatprep.subr.mxu0 0.0
    %270 = vmatpush1.msra.mxu0 0.0
    %271 = vmatprep.subr.mxu0 0.0
    %272 = vmatpush1.msra.mxu0 %v235
    %273 = vmatprep.subr.mxu0 0.0
    %274 = vmatpush2.msra.mxu0 0.0
    %275 = vmatprep.subr.mxu0 0.0
    %276 = vmatpush2.msra.mxu0 0.0
    %277 = vmatprep.subr.mxu0 0.0
    %278 = vmatpush2.msra.mxu0 0.0
    %279 = vmatprep.subr.mxu0 0.0
    %280 = vmatpush2.msra.mxu0 0.0
    %281 = vmatprep.subr.mxu0 0.0
    %282 = vmatpush2.msra.mxu0 0.0
    %283 = vmatprep.subr.mxu0 0.0
    %284 = vmatpush2.msra.mxu0 0.0
    %285 = vmatprep.subr.mxu0 0.0
    %286 = vmatpush2.msra.mxu0 0.0
    %287 = vmatprep.subr.mxu0 0.0
    %288 = vmatpush2.msra.mxu0 0.0
    %289 = vmatprep.subr.mxu0 0.0
    %290 = vmatpush2.msra.mxu0 0.0
    %291 = vmatprep.subr.mxu0 0.0
    %292 = vmatpush2.msra.mxu0 0.0
    %293 = vmatprep.subr.mxu0 0.0
    %294 = vmatpush2.msra.mxu0 0.0
    %295 = vmatprep.subr.mxu0 0.0
    %296 = vmatpush2.msra.mxu0 0.0
    %297 = vmatprep.subr.mxu0 0.0
    %298 = vmatpush2.msra.mxu0 0.0
    %299 = vmatprep.subr.mxu0 0.0
    %300 = vmatpush2.msra.mxu0 0.0
    %301 = vmatprep.subr.mxu0 0.0
    %302 = vmatpush2.msra.mxu0 0.0
    %303 = vmatprep.subr.mxu0 0.0
    %304 = vmatpush2.msra.mxu0 0.0
    %305 = vmatprep.mubr.f32.mxu0 0.0
    %306 = vmatmul.mubr.f32.gmra.mxu0 %v239
    %v307 = vpop.f32.mrf.mxu0
    %v308 = vadd.f32 0.0, %v307
    %v309 = vpop.f32.mrf.mxu0
    %310 = vdwg.mxu0
    %vm311 = vcmask 130048
    %312 = vst.msk [vmem:[#allocation2] sm:$0xff] %vm311, %v308
    // Predicated region
    $region26: #{tpu_custom_call.1} parent=1 // pred_check
      _
    $region27: #{tpu_custom_call.1} parent=1 // pred_check_branch
      %314 = sbr.rel (0) target = $region29
    $region28: #{tpu_custom_call.1} parent=1 // pred_region
      %s316 = ssub.s32 128, 128
      %317 = vsyncadd [#allocation3], %s316
      %s319 = sshll.u32 [#allocation2], 4
      %s320 = int_to_ptr.vmem [resolvable:$true] %s319
      %322 = dma.vmem_to_hbm [thread:$0]  %s320, 128, %s6, [#allocation3]
    $region29: #{tpu_custom_call.1} parent=1 // pred_fallthru
      _
    // Predicated region
    $region30: #{tpu_custom_call.1} parent=1 // pred_check
      _
    $region31: #{tpu_custom_call.1} parent=1 // pred_check_branch
      %324 = sbr.rel (0) target = $region33
    $region32: #{tpu_custom_call.1} parent=1 // pred_region
      %325 = dma.done [#allocation3], 128
    $region33: #{tpu_custom_call.1} parent=1 // pred_fallthru
      _
    %326 = vsyncpa [#allocation3], 1

</llo_original>
